<compile_context>
chip_gen: v6e
topology: v6e:2x2x1
jax: 0.10.0
libtpu: 0.0.40
codegen_flags: <defaults>
</compile_context>

<pallas_src>
import jax
import jax.numpy as jnp
from jax.experimental import pallas as pl
from jax.experimental.pallas import tpu as pltpu


def _resblock1x1_kernel(x_ref, w1_ref, b1_ref, w2_ref, b2_ref, o_ref):
    # x_ref:  (C, TP)  tile of pixels (channels on sublanes, pixels on lanes)
    # w1_ref: (C, C)   conv1 weight, PyTorch layout (C_out, C_in) -- used as-is
    # b1_ref: (C, 1)
    # w2_ref: (C, C)   conv2 weight
    # b2_ref: (C, 1)
    x = x_ref[...]
    h = jnp.maximum(x, 0.0)                                           # ReLU
    h = jnp.dot(w1_ref[...], h, preferred_element_type=jnp.float32)   # 1x1 conv #1
    h = h + b1_ref[...]
    h = jnp.maximum(h, 0.0)                                           # ReLU
    h = jnp.dot(w2_ref[...], h, preferred_element_type=jnp.float32)   # 1x1 conv #2
    h = h + b2_ref[...]
    o_ref[...] = (h + x).astype(o_ref.dtype)                          # residual


def _pick_pixel_tile(hw, target):
    # Biggest lane-dense tile: full spatial extent if it fits the target,
    # otherwise the largest multiple of 128 <= target (the grid uses cdiv and
    # Pallas masks the tail block, so HW does not have to divide the tile).
    if hw <= target:
        return hw
    return max(128, (target // 128) * 128)


def resnet_block_1x1(x_nchw, w1, b1, w2, b2, *, target_tile_pixels=2048):
    """x_nchw: (N, C, H, W) float32.  w*: (C_out, C_in) from Conv2d(C, C, 1)."""
    N, C, H, W = x_nchw.shape
    HW = H * W
    P = N * HW

    # NCHW -> (N, C, H*W): free reshape, no data movement.
    x_flat = x_nchw.reshape(N, C, HW)

    w1_m = jnp.asarray(w1, jnp.float32)                 # (C_out, C_in), no transpose needed
    w2_m = jnp.asarray(w2, jnp.float32)
    b1_c = jnp.asarray(b1, jnp.float32).reshape(C, 1)   # broadcast over the lane axis
    b2_c = jnp.asarray(b2, jnp.float32).reshape(C, 1)

    tp = _pick_pixel_tile(HW, target_tile_pixels)
    grid = (N, pl.cdiv(HW, tp))                         # masked tail on last pixel tile

    # VMEM budget: double-buffered x/out tiles + (double-buffered, constant-index)
    # resident weights/biases.  Only raise the scoped limit when actually needed.
    dt = 4  # f32 bytes
    vmem_needed = 4 * C * tp * dt + 2 * (2 * C * C * dt + 2 * C * dt)
    vmem_limit = None
    if vmem_needed > 16 * 1024 * 1024:
        vmem_limit = min(int(vmem_needed * 3 // 2), 96 * 1024 * 1024)
    # TODO(synk): for very large C (>=1024) the resident (C, C) weights should be
    # single-buffered or tiled along C_out (extra grid axis) to fit v7x's 64 MiB VMEM.

    cost = pl.CostEstimate(
        flops=4 * P * C * C + 4 * P * C,                # two matmuls + bias/relu/residual
        transcendentals=0,
        bytes_accessed=2 * P * C * dt + 2 * C * C * dt + 2 * C * dt,
    )

    y_flat = pl.pallas_call(
        _resblock1x1_kernel,
        out_shape=jax.ShapeDtypeStruct((N, C, HW), x_flat.dtype),
        grid_spec=pltpu.PrefetchScalarGridSpec(
            num_scalar_prefetch=0,
            grid=grid,
            in_specs=[
                pl.BlockSpec((None, C, tp), lambda n, p: (n, 0, p)),   # x tile
                pl.BlockSpec((C, C), lambda n, p: (0, 0)),             # w1 (resident)
                pl.BlockSpec((C, 1), lambda n, p: (0, 0)),             # b1
                pl.BlockSpec((C, C), lambda n, p: (0, 0)),             # w2
                pl.BlockSpec((C, 1), lambda n, p: (0, 0)),             # b2
            ],
            out_specs=pl.BlockSpec((None, C, tp), lambda n, p: (n, 0, p)),
        ),
        compiler_params=pltpu.CompilerParams(
            dimension_semantics=("parallel", "parallel"),
            vmem_limit_bytes=vmem_limit,
        ),
        cost_estimate=cost,
    )(x_flat, w1_m, b1_c, w2_m, b2_c)

    # (N, C, H*W) -> NCHW: free reshape.
    return y_flat.reshape(N, C, H, W)


def _reference(x_nchw, w1, b1, w2, b2):
    # Pure-JAX reference mirroring the PyTorch module (1x1 convs as channel matmuls).
    N, C, H, W = x_nchw.shape
    x = x_nchw.reshape(N, C, H * W)
    h = jnp.maximum(x, 0.0)
    h = jnp.einsum("oi,nip->nop", w1, h) + b1[None, :, None]
    h = jnp.maximum(h, 0.0)
    h = jnp.einsum("oi,nip->nop", w2, h) + b2[None, :, None]
    return (h + x).reshape(N, C, H, W)


if __name__ == "__main__":
    key = jax.random.PRNGKey(0)
    N, C, H, W = 2, 4, 16, 16
    k_x, k_w1, k_b1, k_w2, k_b2 = jax.random.split(key, 5)

    x = jax.random.normal(k_x, (N, C, H, W), dtype=jnp.float32)
    # Deterministic synthetic parameters (Conv2d(C, C, 1) weight (C, C, 1, 1) -> (C, C))
    bound = 1.0 / (C ** 0.5)
    w1 = jax.random.uniform(k_w1, (C, C), jnp.float32, -bound, bound)
    b1 = jax.random.uniform(k_b1, (C,), jnp.float32, -bound, bound)
    w2 = jax.random.uniform(k_w2, (C, C), jnp.float32, -bound, bound)
    b2 = jax.random.uniform(k_b2, (C,), jnp.float32, -bound, bound)

    y = resnet_block_1x1(x, w1, b1, w2, b2)
    y = jax.block_until_ready(y)

    y_ref = _reference(x, w1, b1, w2, b2)
    assert y.shape == (N, C, H, W)
    assert jnp.allclose(y, y_ref, atol=1e-5, rtol=1e-5), "mismatch vs reference"

    print("KERNEL_OK")
</pallas_src>

<mosaic_0001>
module attributes {stable_mosaic.version = 11 : i64} {
  func.func @_resblock1x1_kernel(%arg0: i32, %arg1: i32, %arg2: memref<1x4x256xf32, #tpu.memory_space<vmem>>, %arg3: memref<4x4xf32, #tpu.memory_space<vmem>>, %arg4: memref<4x1xf32, #tpu.memory_space<vmem>>, %arg5: memref<4x4xf32, #tpu.memory_space<vmem>>, %arg6: memref<4x1xf32, #tpu.memory_space<vmem>>, %arg7: memref<1x4x256xf32, #tpu.memory_space<vmem>>) attributes {dimension_semantics = [#tpu.dimension_semantics<parallel>, #tpu.dimension_semantics<parallel>], iteration_bounds = array<i64: 2, 1>, scalar_prefetch = 0 : i64, scratch_operands = 0 : i64, tpu.core_type = #tpu.core_type<tc>, window_params = [{transform_indices = @transform_0, window_bounds = array<i64: 1, 4, 256>}, {pipeline_mode = #tpu.pipeline_mode<synchronous>, transform_indices = @transform_1, window_bounds = array<i64: 4, 4>}, {pipeline_mode = #tpu.pipeline_mode<synchronous>, transform_indices = @transform_2, window_bounds = array<i64: 4, 1>}, {pipeline_mode = #tpu.pipeline_mode<synchronous>, transform_indices = @transform_3, window_bounds = array<i64: 4, 4>}, {pipeline_mode = #tpu.pipeline_mode<synchronous>, transform_indices = @transform_4, window_bounds = array<i64: 4, 1>}, {transform_indices = @transform_5, window_bounds = array<i64: 1, 4, 256>}]} {
    %c0 = arith.constant 0 : index
    %c0_0 = arith.constant 0 : index
    %c0_1 = arith.constant 0 : index
    %0 = vector.load %arg2[%c0, %c0_0, %c0_1] : memref<1x4x256xf32, #tpu.memory_space<vmem>>, vector<1x4x256xf32>
    %1 = vector.shape_cast %0 : vector<1x4x256xf32> to vector<4x256xf32>
    %cst = arith.constant 0.000000e+00 : f32
    %2 = vector.broadcast %cst : f32 to vector<4x256xf32>
    %3 = arith.maximumf %1, %2 : vector<4x256xf32>
    %c0_2 = arith.constant 0 : index
    %c0_3 = arith.constant 0 : index
    %4 = vector.load %arg3[%c0_2, %c0_3] : memref<4x4xf32, #tpu.memory_space<vmem>>, vector<4x4xf32>
    %cst_4 = arith.constant dense<0.000000e+00> : vector<4x256xf32>
    %5 = tpu.matmul %4, %3, %cst_4 {dimension_numbers = #tpu.dot_dimension_numbers<[1], [0], [0], [1], [0, 0, 1, 1], [], []>} : vector<4x4xf32>, vector<4x256xf32>, vector<4x256xf32> -> vector<4x256xf32>
    %c0_5 = arith.constant 0 : index
    %c0_6 = arith.constant 0 : index
    %6 = vector.load %arg4[%c0_5, %c0_6] : memref<4x1xf32, #tpu.memory_space<vmem>>, vector<4x1xf32>
    %7 = vector.broadcast %6 : vector<4x1xf32> to vector<4x256xf32>
    %8 = arith.addf %5, %7 : vector<4x256xf32>
    %cst_7 = arith.constant 0.000000e+00 : f32
    %9 = vector.broadcast %cst_7 : f32 to vector<4x256xf32>
    %10 = arith.maximumf %8, %9 : vector<4x256xf32>
    %c0_8 = arith.constant 0 : index
    %c0_9 = arith.constant 0 : index
    %11 = vector.load %arg5[%c0_8, %c0_9] : memref<4x4xf32, #tpu.memory_space<vmem>>, vector<4x4xf32>
    %cst_10 = arith.constant dense<0.000000e+00> : vector<4x256xf32>
    %12 = tpu.matmul %11, %10, %cst_10 {dimension_numbers = #tpu.dot_dimension_numbers<[1], [0], [0], [1], [0, 0, 1, 1], [], []>} : vector<4x4xf32>, vector<4x256xf32>, vector<4x256xf32> -> vector<4x256xf32>
    %c0_11 = arith.constant 0 : index
    %c0_12 = arith.constant 0 : index
    %13 = vector.load %arg6[%c0_11, %c0_12] : memref<4x1xf32, #tpu.memory_space<vmem>>, vector<4x1xf32>
    %14 = vector.broadcast %13 : vector<4x1xf32> to vector<4x256xf32>
    %15 = arith.addf %12, %14 : vector<4x256xf32>
    %16 = arith.addf %15, %1 : vector<4x256xf32>
    %c0_13 = arith.constant 0 : index
    %c0_14 = arith.constant 0 : index
    %c0_15 = arith.constant 0 : index
    %17 = vector.load %arg7[%c0_13, %c0_14, %c0_15] : memref<1x4x256xf32, #tpu.memory_space<vmem>>, vector<1x4x256xf32>
    %18 = vector.shape_cast %17 : vector<1x4x256xf32> to vector<4x256xf32>
    %19 = vector.shape_cast %16 : vector<4x256xf32> to vector<1x4x256xf32>
    tpu.vector_store %arg7[%c0_13, %c0_14, %c0_15], %19 {strides = array<i32>} : memref<1x4x256xf32, #tpu.memory_space<vmem>>, vector<1x4x256xf32>,
    return
  }
  func.func @transform_0(%arg0: i32, %arg1: i32) -> (i32, i32, i32) {
    %c0_i32 = arith.constant 0 : i32
    %c0_i32_0 = arith.constant 0 : i32
    return %arg0, %c0_i32, %arg1 : i32, i32, i32
  }
  func.func @transform_1(%arg0: i32, %arg1: i32) -> (i32, i32) {
    %c0_i32 = arith.constant 0 : i32
    %c0_i32_0 = arith.constant 0 : i32
    %c0_i32_1 = arith.constant 0 : i32
    return %c0_i32, %c0_i32_0 : i32, i32
  }
  func.func @transform_2(%arg0: i32, %arg1: i32) -> (i32, i32) {
    %c0_i32 = arith.constant 0 : i32
    %c0_i32_0 = arith.constant 0 : i32
    %c0_i32_1 = arith.constant 0 : i32
    return %c0_i32, %c0_i32_0 : i32, i32
  }
  func.func @transform_3(%arg0: i32, %arg1: i32) -> (i32, i32) {
    %c0_i32 = arith.constant 0 : i32
    %c0_i32_0 = arith.constant 0 : i32
    %c0_i32_1 = arith.constant 0 : i32
    return %c0_i32, %c0_i32_0 : i32, i32
  }
  func.func @transform_4(%arg0: i32, %arg1: i32) -> (i32, i32) {
    %c0_i32 = arith.constant 0 : i32
    %c0_i32_0 = arith.constant 0 : i32
    %c0_i32_1 = arith.constant 0 : i32
    return %c0_i32, %c0_i32_0 : i32, i32
  }
  func.func @transform_5(%arg0: i32, %arg1: i32) -> (i32, i32, i32) {
    %c0_i32 = arith.constant 0 : i32
    %c0_i32_0 = arith.constant 0 : i32
    return %arg0, %c0_i32, %arg1 : i32, i32, i32
  }
}

</mosaic_0001>

<llo_original>
// kernel: tpu_custom_call.1
$region0: #{tpu_custom_call.1}
  #allocation0 [shape = 'u32[]', space=smem, size = 0x4, offset = 0x4, fixed_abs, tag = 'smem constant byte address 0x4 - core index']
  #allocation1 [shape = 'u32[144,128]{1,0:T(1,128)}', space=vmem, size = 0x12000, scoped, tag = 'internal scratch']
  %s0 = inlined_call_operand.hbm [shape: f32[2,4,256], index: 0, kind: input, shape index: {}]
  %s1 = inlined_call_operand.vmem [shape: f32[4,4], index: 1, kind: input, shape index: {}]
  %s2 = inlined_call_operand.vmem [shape: f32[4,1], index: 2, kind: input, shape index: {}]
  %s3 = inlined_call_operand.vmem [shape: f32[4,4], index: 3, kind: input, shape index: {}]
  %s4 = inlined_call_operand.vmem [shape: f32[4,1], index: 4, kind: input, shape index: {}]
  %s5 = inlined_call_operand.hbm [shape: f32[2,4,256], index: 5, kind: output, shape index: {}]
  %s6 = sld [smem:[#allocation0]]
  $region57: #{tpu_custom_call.1} parent=0
    _
  %s8 = ssub.s32 1, %s6
  %s9 = scalar_select 0, %s8, %s6
  $region1: #{tpu_custom_call.1} parent=0
    #allocation2 [shape = 'u8[8192]{0}', space=vmem, size = 0x2000, scoped, tag = 'input window, operand 0']
    #allocation3 [shape = 's32[2]{0}', space=sflag, size = 0x8, scoped, tag = 'scoped memory for tpu_custom_call.1']
    #allocation4 [shape = 's32[2]{0}', space=sflag, size = 0x8, scoped, tag = 'scoped memory for tpu_custom_call.1']
    #allocation5 [shape = 'u8[8192]{0}', space=vmem, size = 0x2000, scoped, tag = 'output window, operand 0']
    %10 = vsyncpa [#allocation3], 0
    %s11 = scalar_lea.sflag [#allocation3], 1
    %12 = vsyncpa %s11, 0
    %13 = vsyncpa [#allocation4], 0
    %s14 = scalar_lea.sflag [#allocation4], 1
    %15 = vsyncpa %s14, 0
    loop: start=0, step=1, limit=4
    $region2: #{tpu_custom_call.1} parent=1 // loop_pre_header
      _
    $region3: #{tpu_custom_call.1} parent=1 // loop_header
      %s17 = sphi 0, %s21
      %p18 = scmp.ge.s32.totalorder %s17, 4
      %s24 = sphi 0, %s36
      %s25 = sphi 0, %s32
      %s26 = sphi 0, %s24
      %s27 = sphi 0, %s25
      %s28 = sphi 0, %s26
      %s29 = sphi 0, %s27
      %s41 = sphi 0, %s43
      %s44 = sphi 0, %s41
      %s45 = sphi 0, %s44
      %s61 = sphi 0, %s45
      %s65 = sphi 0, %s65
      %s67 = sphi 0, %s65
      %s68 = sphi 0, %s67
      %s82 = sphi 0, %s68
      %s86 = sphi 0, %s86
      %s88 = sphi 0, %s86
      %s89 = sphi 0, %s88
      %s103 = sphi 0, %s89
      %s107 = sphi 0, %s107
      %s109 = sphi 0, %s107
      %s110 = sphi 0, %s109
      %s124 = sphi 0, %s110
      %s128 = sphi 0, %s128
      %s130 = sphi 0, %s128
      %s131 = sphi 0, %s130
      %s145 = sphi 0, %s131
      %s153 = sphi 0, %s155
      %s156 = sphi 0, %s153
      %s157 = sphi 0, %s156
      %s173 = sphi 0, %s157
    $region4: #{tpu_custom_call.1} parent=1 // loop_header_branch
      %20 = sbr.rel (%p18) target = $region8
    $region5: #{tpu_custom_call.1} parent=1 // loop_body
      %s22 = ssub.s32 %s17, 1
      %s23 = ssub.s32 %s17, 2
      %s30 = sadd.s32 1, %s25
      %p31 = scmp.ge.s32.totalorder %s30, 1
      %s32 = scalar_select %p31, 0, %s30
      %s33 = sadd.s32 1, %s24
      %s34 = scalar_select %p31, %s33, %s24
      %p35 = scmp.ge.s32.totalorder %s34, 2
      %s36 = scalar_select %p35, 0, %s34
      %s37 = ssub.s32 %s24, %s36
      %s38 = ssub.s32 %s25, %s32
      %s39 = sor.u32 %s37, %s38
      %p40 = scmp.eq.s32.totalorder %s39, 0
      %s42 = sadd.s32 %s41, 1
      %s43 = scalar_select %p40, %s41, %s42
      %p46 = pneg %p40
      %p47 = scmp.eq.s32.totalorder %s17, 1
      %p48 = por %p46, %p47
      %p49 = scmp.ne.s32.totalorder %s41, %s44
      %p50 = scmp.eq.s32.totalorder %s17, 0
      %p51 = por %p49, %p50
      %p52 = scmp.ne.s32.totalorder %s41, %s44
      %p53 = scmp.eq.s32.totalorder %s22, 1
      %p54 = por %p52, %p53
      %p55 = scmp.ne.s32.totalorder %s44, %s45
      %p56 = scmp.eq.s32.totalorder %s22, 0
      %p57 = por %p55, %p56
      %p58 = scmp.ne.s32.totalorder %s44, %s45
      %p59 = scmp.eq.s32.totalorder %s23, 1
      %p60 = por %p58, %p59
      %p62 = scmp.ne.s32.totalorder %s45, %s61
      %p63 = scmp.eq.s32.totalorder %s23, 0
      %p64 = por %p62, %p63
      %s66 = sadd.s32 %s65, 1
      %p69 = scmp.eq.s32.totalorder %s17, 1
      %p70 = scmp.ne.s32.totalorder %s65, %s67
      %p71 = scmp.eq.s32.totalorder %s17, 0
      %p72 = por %p70, %p71
      %p73 = scmp.ne.s32.totalorder %s65, %s67
      %p74 = scmp.eq.s32.totalorder %s22, 1
      %p75 = por %p73, %p74
      %p76 = scmp.ne.s32.totalorder %s67, %s68
      %p77 = scmp.eq.s32.totalorder %s22, 0
      %p78 = por %p76, %p77
      %p79 = scmp.ne.s32.totalorder %s67, %s68
      %p80 = scmp.eq.s32.totalorder %s23, 1
      %p81 = por %p79, %p80
      %p83 = scmp.ne.s32.totalorder %s68, %s82
      %p84 = scmp.eq.s32.totalorder %s23, 0
      %p85 = por %p83, %p84
      %s87 = sadd.s32 %s86, 1
      %p90 = scmp.eq.s32.totalorder %s17, 1
      %p91 = scmp.ne.s32.totalorder %s86, %s88
      %p92 = scmp.eq.s32.totalorder %s17, 0
      %p93 = por %p91, %p92
      %p94 = scmp.ne.s32.totalorder %s86, %s88
      %p95 = scmp.eq.s32.totalorder %s22, 1
      %p96 = por %p94, %p95
      %p97 = scmp.ne.s32.totalorder %s88, %s89
      %p98 = scmp.eq.s32.totalorder %s22, 0
      %p99 = por %p97, %p98
      %p100 = scmp.ne.s32.totalorder %s88, %s89
      %p101 = scmp.eq.s32.totalorder %s23, 1
      %p102 = por %p100, %p101
      %p104 = scmp.ne.s32.totalorder %s89, %s103
      %p105 = scmp.eq.s32.totalorder %s23, 0
      %p106 = por %p104, %p105
      %s108 = sadd.s32 %s107, 1
      %p111 = scmp.eq.s32.totalorder %s17, 1
      %p112 = scmp.ne.s32.totalorder %s107, %s109
      %p113 = scmp.eq.s32.totalorder %s17, 0
      %p114 = por %p112, %p113
      %p115 = scmp.ne.s32.totalorder %s107, %s109
      %p116 = scmp.eq.s32.totalorder %s22, 1
      %p117 = por %p115, %p116
      %p118 = scmp.ne.s32.totalorder %s109, %s110
      %p119 = scmp.eq.s32.totalorder %s22, 0
      %p120 = por %p118, %p119
      %p121 = scmp.ne.s32.totalorder %s109, %s110
      %p122 = scmp.eq.s32.totalorder %s23, 1
      %p123 = por %p121, %p122
      %p125 = scmp.ne.s32.totalorder %s110, %s124
      %p126 = scmp.eq.s32.totalorder %s23, 0
      %p127 = por %p125, %p126
      %s129 = sadd.s32 %s128, 1
      %p132 = scmp.eq.s32.totalorder %s17, 1
      %p133 = scmp.ne.s32.totalorder %s128, %s130
      %p134 = scmp.eq.s32.totalorder %s17, 0
      %p135 = por %p133, %p134
      %p136 = scmp.ne.s32.totalorder %s128, %s130
      %p137 = scmp.eq.s32.totalorder %s22, 1
      %p138 = por %p136, %p137
      %p139 = scmp.ne.s32.totalorder %s130, %s131
      %p140 = scmp.eq.s32.totalorder %s22, 0
      %p141 = por %p139, %p140
      %p142 = scmp.ne.s32.totalorder %s130, %s131
      %p143 = scmp.eq.s32.totalorder %s23, 1
      %p144 = por %p142, %p143
      %p146 = scmp.ne.s32.totalorder %s131, %s145
      %p147 = scmp.eq.s32.totalorder %s23, 0
      %p148 = por %p146, %p147
      %s149 = ssub.s32 %s24, %s36
      %s150 = ssub.s32 %s25, %s32
      %s151 = sor.u32 %s149, %s150
      %p152 = scmp.eq.s32.totalorder %s151, 0
      %s154 = sadd.s32 %s153, 1
      %s155 = scalar_select %p152, %s153, %s154
      %p158 = pneg %p152
      %p159 = scmp.eq.s32.totalorder %s17, 1
      %p160 = por %p158, %p159
      %p161 = scmp.ne.s32.totalorder %s153, %s156
      %p162 = scmp.eq.s32.totalorder %s17, 0
      %p163 = por %p161, %p162
      %p164 = scmp.ne.s32.totalorder %s153, %s156
      %p165 = scmp.eq.s32.totalorder %s22, 1
      %p166 = por %p164, %p165
      %p167 = scmp.ne.s32.totalorder %s156, %s157
      %p168 = scmp.eq.s32.totalorder %s22, 0
      %p169 = por %p167, %p168
      %p170 = scmp.ne.s32.totalorder %s156, %s157
      %p171 = scmp.eq.s32.totalorder %s23, 1
      %p172 = por %p170, %p171
      %p174 = scmp.ne.s32.totalorder %s157, %s173
      %p175 = scmp.eq.s32.totalorder %s23, 0
      %p176 = por %p174, %p175
      %p177 = scmp.le.s32.totalorder 1, %s17
      %p178 = scmp.lt.s32.totalorder %s17, 3
      %p179 = pnand %p177, %p178
      %p180 = pneg %p179
      // Predicated region
      $region9: #{tpu_custom_call.1} parent=5 // pred_check
        _
      $region10: #{tpu_custom_call.1} parent=5 // pred_check_branch
        %182 = sbr.rel (%p179) target = $region12
      $region11: #{tpu_custom_call.1} parent=5 // pred_region
        %s183 = ssub.s32 %s17, 1
        // Predicated region
        $region13: #{tpu_custom_call.1} parent=11 // pred_check
          %p184 = pneg %p78
        $region14: #{tpu_custom_call.1} parent=11 // pred_check_branch
          %186 = sbr.rel (%p184) target = $region16
        $region15: #{tpu_custom_call.1} parent=11 // pred_region
          _
        $region16: #{tpu_custom_call.1} parent=11 // pred_fallthru
          _
        // Predicated region
        $region17: #{tpu_custom_call.1} parent=11 // pred_check
          %p187 = pneg %p99
        $region18: #{tpu_custom_call.1} parent=11 // pred_check_branch
          %189 = sbr.rel (%p187) target = $region20
        $region19: #{tpu_custom_call.1} parent=11 // pred_region
          _
        $region20: #{tpu_custom_call.1} parent=11 // pred_fallthru
          _
        // Predicated region
        $region21: #{tpu_custom_call.1} parent=11 // pred_check
          %p190 = pneg %p120
        $region22: #{tpu_custom_call.1} parent=11 // pred_check_branch
          %192 = sbr.rel (%p190) target = $region24
        $region23: #{tpu_custom_call.1} parent=11 // pred_region
          _
        $region24: #{tpu_custom_call.1} parent=11 // pred_fallthru
          _
        // Predicated region
        $region25: #{tpu_custom_call.1} parent=11 // pred_check
          %p193 = pneg %p141
        $region26: #{tpu_custom_call.1} parent=11 // pred_check_branch
          %195 = sbr.rel (%p193) target = $region28
        $region27: #{tpu_custom_call.1} parent=11 // pred_region
          _
        $region28: #{tpu_custom_call.1} parent=11 // pred_fallthru
          _
      $region12: #{tpu_custom_call.1} parent=5 // pred_fallthru
        _
      %p196 = scmp.lt.s32.totalorder %s17, 2
      // Predicated region
      $region29: #{tpu_custom_call.1} parent=5 // pred_check
        %p197 = pneg %p196
      $region30: #{tpu_custom_call.1} parent=5 // pred_check_branch
        %199 = sbr.rel (%p197) target = $region32
      $region31: #{tpu_custom_call.1} parent=5 // pred_region
        // Predicated region
        $region33: #{tpu_custom_call.1} parent=31 // pred_check
          %p200 = pneg %p51
        $region34: #{tpu_custom_call.1} parent=31 // pred_check_branch
          %202 = sbr.rel (%p200) target = $region36
        $region35: #{tpu_custom_call.1} parent=31 // pred_region
          %s203 = sand.u32 %s41, 1
          %s204 = scalar_lea.sflag [#allocation3], %s203
          %s205 = sand.u32 %s41, 1
          %s206 = smul.addr %s205, 8
          %s207 = scalar_lea.vmem [#allocation2], %s206
          %s208 = smul.u32 2, %s25
          %s210 = ssub.s32 128, 128
          %211 = vsyncadd %s204, %s210
          %s212 = smul.addr %s24, 2
          %s213 = sadd.s32 %s208, %s212
          %s214 = smul.addr %s213, 64
          %s215 = scalar_lea.hbm %s0, %s214
          %s217 = sshll.u32 %s207, 4
          %s218 = int_to_ptr.vmem [resolvable:$true] %s217
          %220 = dma.hbm_to_vmem [thread:$0]  %s215, 128, %s218, %s204
        $region36: #{tpu_custom_call.1} parent=31 // pred_fallthru
          _
      $region32: #{tpu_custom_call.1} parent=5 // pred_fallthru
        _
      %p221 = scmp.le.s32.totalorder 1, %s17
      %p222 = scmp.lt.s32.totalorder %s17, 3
      %p223 = pnand %p221, %p222
      %p224 = pneg %p223
      // Predicated region
      $region37: #{tpu_custom_call.1} parent=5 // pred_check
        _
      $region38: #{tpu_custom_call.1} parent=5 // pred_check_branch
        %226 = sbr.rel (%p223) target = $region40
      $region39: #{tpu_custom_call.1} parent=5 // pred_region
        %s227 = ssub.s32 %s17, 1
        %s228 = sand.u32 %s44, 1
        %s229 = scalar_lea.sflag [#allocation3], %s228
        %s230 = sand.u32 %s44, 1
        %s231 = smul.addr %s230, 8
        %s232 = scalar_lea.vmem [#allocation2], %s231
        // Predicated region
        $region41: #{tpu_custom_call.1} parent=39 // pred_check
          %p233 = pneg %p57
        $region42: #{tpu_custom_call.1} parent=39 // pred_check_branch
          %235 = sbr.rel (%p233) target = $region44
        $region43: #{tpu_custom_call.1} parent=39 // pred_region
          %236 = dma.done %s229, 128
        $region44: #{tpu_custom_call.1} parent=39 // pred_fallthru
          _
        %s237 = sand.u32 %s44, 1
        %s238 = scalar_lea.sflag [#allocation3], %s237
        %s239 = sand.u32 %s44, 1
        %s240 = smul.addr %s239, 8
        %s241 = scalar_lea.vmem [#allocation2], %s240
        %p242 = pneg %p57
        %p243 = pneg %p54
        %p244 = pneg %p78
        %p245 = pneg %p75
        %p246 = pneg %p99
        %p247 = pneg %p96
        %p248 = pneg %p120
        %p249 = pneg %p117
        %p250 = pneg %p141
        %p251 = pneg %p138
        %p252 = pneg %p169
        %p253 = pneg %p166
        %s254 = sand.u32 %s156, 1
        %s255 = scalar_lea.sflag [#allocation4], %s254
        %s256 = sand.u32 %s156, 1
        %s257 = smul.addr %s256, 8
        %s258 = scalar_lea.vmem [#allocation5], %s257
        %s259 = smul.u32 2, %s27
        %s260 = smul.u32 2, %s27
        %v261 = vld [vmem:[%s232] sm:$0xff]
        %v262 = vmax.f32 %v261, 0.0
        %v263 = vld [vmem:[%s1] sm:$0xf]
        %v264 = vld [vmem:[%s2] sm:$0xf]
        %266 = vset.pattern.permute.xlu0 0
        %267 = vperm.xlu0 %266, %v264
        %v268 = vpop.permute.xlu0 %267
        %v271 = vcombine.high %v262, %v262
        %vm272 = vcmask 31744
        %v274 = vsel %vm272, %v263, 0
        %vm276 = vcmask 1043456
        %v277 = vsel %vm276, %v262, 0
        %v279 = vsel %vm276, %v271, 0
        %281 = vmatprep.subr.mxu0 0.0
        %282 = vmatpush1.msra.mxu0 0.0
        %283 = vmatprep.subr.mxu0 0.0
        %284 = vmatpush1.msra.mxu0 0.0
        %285 = vmatprep.subr.mxu0 0.0
        %286 = vmatpush1.msra.mxu0 0.0
        %287 = vmatprep.subr.mxu0 0.0
        %288 = vmatpush1.msra.mxu0 0.0
        %289 = vmatprep.subr.mxu0 0.0
        %290 = vmatpush1.msra.mxu0 0.0
        %291 = vmatprep.subr.mxu0 0.0
        %292 = vmatpush1.msra.mxu0 0.0
        %293 = vmatprep.subr.mxu0 0.0
        %294 = vmatpush1.msra.mxu0 0.0
        %295 = vmatprep.subr.mxu0 0.0
        %296 = vmatpush1.msra.mxu0 0.0
        %297 = vmatprep.subr.mxu0 0.0
        %298 = vmatpush1.msra.mxu0 0.0
        %299 = vmatprep.subr.mxu0 0.0
        %300 = vmatpush1.msra.mxu0 0.0
        %301 = vmatprep.subr.mxu0 0.0
        %302 = vmatpush1.msra.mxu0 0.0
        %303 = vmatprep.subr.mxu0 0.0
        %304 = vmatpush1.msra.mxu0 0.0
        %305 = vmatprep.subr.mxu0 0.0
        %306 = vmatpush1.msra.mxu0 0.0
        %307 = vmatprep.subr.mxu0 0.0
        %308 = vmatpush1.msra.mxu0 0.0
        %309 = vmatprep.subr.mxu0 0.0
        %310 = vmatpush1.msra.mxu0 0.0
        %311 = vmatprep.subr.mxu0 %v279
        %312 = vmatpush1.msra.mxu0 %v277
        %313 = vmatprep.subr.mxu0 0.0
        %314 = vmatpush2.msra.mxu0 0.0
        %315 = vmatprep.subr.mxu0 0.0
        %316 = vmatpush2.msra.mxu0 0.0
        %317 = vmatprep.subr.mxu0 0.0
        %318 = vmatpush2.msra.mxu0 0.0
        %319 = vmatprep.subr.mxu0 0.0
        %320 = vmatpush2.msra.mxu0 0.0
        %321 = vmatprep.subr.mxu0 0.0
        %322 = vmatpush2.msra.mxu0 0.0
        %323 = vmatprep.subr.mxu0 0.0
        %324 = vmatpush2.msra.mxu0 0.0
        %325 = vmatprep.subr.mxu0 0.0
        %326 = vmatpush2.msra.mxu0 0.0
        %327 = vmatprep.subr.mxu0 0.0
        %328 = vmatpush2.msra.mxu0 0.0
        %329 = vmatprep.subr.mxu0 0.0
        %330 = vmatpush2.msra.mxu0 0.0
        %331 = vmatprep.subr.mxu0 0.0
        %332 = vmatpush2.msra.mxu0 0.0
        %333 = vmatprep.subr.mxu0 0.0
        %334 = vmatpush2.msra.mxu0 0.0
        %335 = vmatprep.subr.mxu0 0.0
        %336 = vmatpush2.msra.mxu0 0.0
        %337 = vmatprep.subr.mxu0 0.0
        %338 = vmatpush2.msra.mxu0 0.0
        %339 = vmatprep.subr.mxu0 0.0
        %340 = vmatpush2.msra.mxu0 0.0
        %341 = vmatprep.subr.mxu0 0.0
        %342 = vmatpush2.msra.mxu0 0.0
        %343 = vmatprep.subr.mxu0 0.0
        %344 = vmatpush2.msra.mxu0 0.0
        %345 = vmatprep.mubr.f32.mxu0 0.0
        %346 = vmatmul.mubr.f32.gmra.mxu0 %v274
        %v347 = vpop.f32.mrf.mxu0
        %v348 = vadd.f32 %v268, %v347
        %v349 = vpop.f32.mrf.mxu0
        %v350 = vadd.f32 %v268, %v349
        %351 = vdwg.mxu0
        %v352 = vmax.f32 %v348, 0.0
        %v353 = vmax.f32 %v350, 0.0
        %v354 = vld [vmem:[%s3] sm:$0xf]
        %v355 = vld [vmem:[%s4] sm:$0xf]
        %357 = vset.pattern.permute.xlu0 0
        %358 = vperm.xlu0 %357, %v355
        %v359 = vpop.permute.xlu0 %358
        %v362 = vsel %vm272, %v354, 0
        %v365 = vsel %vm276, %v352, 0
        %v368 = vsel %vm276, %v353, 0
        %370 = vmatprep.subr.mxu0 0.0
        %371 = vmatpush1.msra.mxu0 0.0
        %372 = vmatprep.subr.mxu0 0.0
        %373 = vmatpush1.msra.mxu0 0.0
        %374 = vmatprep.subr.mxu0 0.0
        %375 = vmatpush1.msra.mxu0 0.0
        %376 = vmatprep.subr.mxu0 0.0
        %377 = vmatpush1.msra.mxu0 0.0
        %378 = vmatprep.subr.mxu0 0.0
        %379 = vmatpush1.msra.mxu0 0.0
        %380 = vmatprep.subr.mxu0 0.0
        %381 = vmatpush1.msra.mxu0 0.0
        %382 = vmatprep.subr.mxu0 0.0
        %383 = vmatpush1.msra.mxu0 0.0
        %384 = vmatprep.subr.mxu0 0.0
        %385 = vmatpush1.msra.mxu0 0.0
        %386 = vmatprep.subr.mxu0 0.0
        %387 = vmatpush1.msra.mxu0 0.0
        %388 = vmatprep.subr.mxu0 0.0
        %389 = vmatpush1.msra.mxu0 0.0
        %390 = vmatprep.subr.mxu0 0.0
        %391 = vmatpush1.msra.mxu0 0.0
        %392 = vmatprep.subr.mxu0 0.0
        %393 = vmatpush1.msra.mxu0 0.0
        %394 = vmatprep.subr.mxu0 0.0
        %395 = vmatpush1.msra.mxu0 0.0
        %396 = vmatprep.subr.mxu0 0.0
        %397 = vmatpush1.msra.mxu0 0.0
        %398 = vmatprep.subr.mxu0 0.0
        %399 = vmatpush1.msra.mxu0 0.0
        %400 = vmatprep.subr.mxu0 %v368
        %401 = vmatpush1.msra.mxu0 %v365
        %402 = vmatprep.subr.mxu0 0.0
        %403 = vmatpush2.msra.mxu0 0.0
        %404 = vmatprep.subr.mxu0 0.0
        %405 = vmatpush2.msra.mxu0 0.0
        %406 = vmatprep.subr.mxu0 0.0
        %407 = vmatpush2.msra.mxu0 0.0
        %408 = vmatprep.subr.mxu0 0.0
        %409 = vmatpush2.msra.mxu0 0.0
        %410 = vmatprep.subr.mxu0 0.0
        %411 = vmatpush2.msra.mxu0 0.0
        %412 = vmatprep.subr.mxu0 0.0
        %413 = vmatpush2.msra.mxu0 0.0
        %414 = vmatprep.subr.mxu0 0.0
        %415 = vmatpush2.msra.mxu0 0.0
        %416 = vmatprep.subr.mxu0 0.0
        %417 = vmatpush2.msra.mxu0 0.0
        %418 = vmatprep.subr.mxu0 0.0
        %419 = vmatpush2.msra.mxu0 0.0
        %420 = vmatprep.subr.mxu0 0.0
        %421 = vmatpush2.msra.mxu0 0.0
        %422 = vmatprep.subr.mxu0 0.0
        %423 = vmatpush2.msra.mxu0 0.0
        %424 = vmatprep.subr.mxu0 0.0
        %425 = vmatpush2.msra.mxu0 0.0
        %426 = vmatprep.subr.mxu0 0.0
        %427 = vmatpush2.msra.mxu0 0.0
        %428 = vmatprep.subr.mxu0 0.0
        %429 = vmatpush2.msra.mxu0 0.0
        %430 = vmatprep.subr.mxu0 0.0
        %431 = vmatpush2.msra.mxu0 0.0
        %432 = vmatprep.subr.mxu0 0.0
        %433 = vmatpush2.msra.mxu0 0.0
        %434 = vmatprep.mubr.f32.mxu0 0.0
        %435 = vmatmul.mubr.f32.gmra.mxu0 %v362
        %v436 = vpop.f32.mrf.mxu0
        %v437 = vadd.f32 %v359, %v436
        %v438 = vpop.f32.mrf.mxu0
        %v439 = vadd.f32 %v359, %v438
        %440 = vdwg.mxu0
        %v442 = vcombine.high %v261, %v261
        %v444 = vadd.f32 %v437, %v261
        %v445 = vadd.f32 %v439, %v442
        %v448 = vcombine.low %v444, %v445
        %450 = vst [vmem:[%s258] sm:$0xff] %v448
        %s451 = sand.u32 %s156, 1
        %s452 = scalar_lea.sflag [#allocation4], %s451
        %s453 = sand.u32 %s156, 1
        %s454 = smul.addr %s453, 8
        %s455 = scalar_lea.vmem [#allocation5], %s454
        // Predicated region
        $region45: #{tpu_custom_call.1} parent=39 // pred_check
          %p456 = pneg %p166
        $region46: #{tpu_custom_call.1} parent=39 // pred_check_branch
          %458 = sbr.rel (%p456) target = $region48
        $region47: #{tpu_custom_call.1} parent=39 // pred_region
          %s459 = smul.u32 2, %s27
          %s461 = ssub.s32 128, 128
          %462 = vsyncadd %s452, %s461
          %s463 = smul.addr %s26, 2
          %s464 = sadd.s32 %s459, %s463
          %s465 = smul.addr %s464, 64
          %s466 = scalar_lea.hbm %s5, %s465
          %s468 = sshll.u32 %s455, 4
          %s469 = int_to_ptr.vmem [resolvable:$true] %s468
          %471 = dma.vmem_to_hbm [thread:$0]  %s469, 128, %s466, %s452
        $region48: #{tpu_custom_call.1} parent=39 // pred_fallthru
          _
      $region40: #{tpu_custom_call.1} parent=5 // pred_fallthru
        _
      %p472 = scmp.le.s32.totalorder 2, %s17
      // Predicated region
      $region49: #{tpu_custom_call.1} parent=5 // pred_check
        %p473 = pneg %p472
      $region50: #{tpu_custom_call.1} parent=5 // pred_check_branch
        %475 = sbr.rel (%p473) target = $region52
      $region51: #{tpu_custom_call.1} parent=5 // pred_region
        %s476 = ssub.s32 %s17, 2
        // Predicated region
        $region53: #{tpu_custom_call.1} parent=51 // pred_check
          %p477 = pneg %p172
        $region54: #{tpu_custom_call.1} parent=51 // pred_check_branch
          %479 = sbr.rel (%p477) target = $region56
        $region55: #{tpu_custom_call.1} parent=51 // pred_region
          %s480 = sand.u32 %s157, 1
          %s481 = scalar_lea.sflag [#allocation4], %s480
          %s482 = sand.u32 %s157, 1
          %s483 = smul.addr %s482, 8
          %s484 = scalar_lea.vmem [#allocation5], %s483
          %485 = dma.done %s481, 128
        $region56: #{tpu_custom_call.1} parent=51 // pred_fallthru
          _
      $region52: #{tpu_custom_call.1} parent=5 // pred_fallthru
        _
    $region6: #{tpu_custom_call.1} parent=1 // loop_footer
      %s21 = sadd.s32 1, %s17
    $region7: #{tpu_custom_call.1} parent=1 // loop_footer_branch
      %16 = sbr.rel target = $region3
    $region8: #{tpu_custom_call.1} parent=1 // loop_exit
      _
    %486 = vsyncpa [#allocation3], 1
    %s487 = scalar_lea.sflag [#allocation3], 1
    %488 = vsyncpa %s487, 1
    %489 = vsyncpa [#allocation4], 1
    %s490 = scalar_lea.sflag [#allocation4], 1
    %491 = vsyncpa %s490, 1

</llo_original>
